<compile_context>
chip_gen: v7x
topology: tpu7x:2x2x1
jax: 0.10.0
libtpu: 0.0.40
codegen_flags: <defaults>
</compile_context>

<pallas_src>
import functools

import jax
import jax.numpy as jnp
from jax.experimental import pallas as pl
from jax.experimental.pallas import tpu as pltpu

_LANE = 128
_CHUNK = 2048  # lanes per in-register chunk of the fused elementwise chain


def _make_kernel(tb, dot_precision):
    chunk = min(_CHUNK, tb)

    def kernel(xT_ref, w1_ref, b1_ref, w2_ref, b2_ref, o_ref):
        # xT: (10, tb) batch-on-lanes; w1: (16, 10); b1/w2: (16, 1); b2: (1, 1)
        w1 = w1_ref[...]
        b1 = b1_ref[...]
        w2 = w2_ref[...]
        b2 = b2_ref[...]
        # Static chunk loop: each chunk's bias->relu->mul->reduce->sigmoid chain
        # stays in vregs; only the matmul input load and the (1, chunk) store
        # touch VMEM.
        for j in range(0, tb, chunk):
            c = min(chunk, tb - j)
            x_c = xT_ref[:, j:j + c]
            # Layer 1 on the MXU, f32 accumulate.
            h = jnp.dot(w1, x_c, preferred_element_type=jnp.float32,
                        precision=dot_precision)
            h = jnp.maximum(h + b1, 0.0)
            # Layer 2 (out_features=1) on VPU/XLU: broadcast-mul + 16-sublane
            # reduce, keeping full f32 precision.
            # TODO(synk): if a bundle dump shows VALU/vst binding, switch this to
            # a (1,16)@(16,chunk) MXU matmul instead (MXU is nearly idle here).
            z = jnp.sum(w2 * h, axis=0, keepdims=True) + b2
            o_ref[:, j:j + c] = jax.nn.sigmoid(z).astype(o_ref.dtype)

    return kernel


@functools.partial(jax.jit, static_argnames=("tb", "precision", "x_feature_major"))
def simple_nn_forward(x, w1, b1, w2, b2, *, tb=131072, precision="bf16",
                      x_feature_major=False):
    """Forward pass matching PyTorch SimpleNN.

    x:  (B, 10) float32, or (10, B) if x_feature_major=True (preferred: skips
        the wrapper-side HBM transpose).
    w1: (16, 10), b1: (16,), w2: (1, 16), b2: (1,)   (PyTorch nn.Linear shapes)
    precision: "bf16" (default, half the HBM traffic, f32 accumulate) or "f32"
        (f32 I/O + Precision.HIGHEST MXU passes for strict parity).
    Returns (B, 1) float32.
    """
    hid, in_f = w1.shape  # (16, 10)
    if x_feature_major:
        assert x.shape[0] == in_f
        B = x.shape[1]
    else:
        assert x.shape[1] == in_f
        B = x.shape[0]

    compute_dtype = jnp.bfloat16 if precision == "bf16" else jnp.float32
    dot_precision = None if precision == "bf16" else jax.lax.Precision.HIGHEST

    # Cast BEFORE any layout copies so the pad/transpose moves half the bytes.
    x_cd = x.astype(compute_dtype)
    xT = x_cd if x_feature_major else x_cd.T           # (10, B)

    # Pad batch (lane) axis only to a multiple of 128, then shrink the tile so
    # the grid divides evenly — tail padding stays < grid*128 samples.
    B128 = pl.cdiv(B, _LANE) * _LANE
    tb_req = max(_LANE, (int(tb) // _LANE) * _LANE)
    grid_n = pl.cdiv(B128, tb_req)
    tb_eff = pl.cdiv(B128 // _LANE, grid_n) * _LANE
    B_pad = grid_n * tb_eff

    if B_pad != B:
        xT = jnp.pad(xT, ((0, 0), (0, B_pad - B)))

    w1_k = w1.astype(compute_dtype)                     # (16, 10)
    b1_col = b1.reshape(hid, 1).astype(jnp.float32)     # (16, 1)
    w2_col = w2.reshape(hid, 1).astype(jnp.float32)     # (16, 1)
    b2_2d = b2.reshape(1, 1).astype(jnp.float32)        # (1, 1)

    # VMEM budget: double-buffered input + output tiles plus headroom, capped at
    # v7x's 64 MiB physical VMEM.
    itemsize = jnp.dtype(compute_dtype).itemsize
    in_tile = 16 * tb_eff * itemsize                    # 10 rows pad to 16 sublanes
    out_tile = 8 * tb_eff * 4                           # (1, tb) f32 pads to 8 sublanes
    vmem_limit = int(min(max(2 * (in_tile + out_tile) + (8 << 20), 32 << 20),
                         64 << 20))

    out_T = pl.pallas_call(
        _make_kernel(tb_eff, dot_precision),
        out_shape=jax.ShapeDtypeStruct((1, B_pad), jnp.float32),
        grid_spec=pltpu.PrefetchScalarGridSpec(
            num_scalar_prefetch=0,
            grid=(grid_n,),
            in_specs=[
                pl.BlockSpec((in_f, tb_eff), lambda i: (0, i)),   # x tile (batch tiled)
                pl.BlockSpec((hid, in_f), lambda i: (0, 0)),      # w1 (resident)
                pl.BlockSpec((hid, 1), lambda i: (0, 0)),         # b1
                pl.BlockSpec((hid, 1), lambda i: (0, 0)),         # w2 column
                pl.BlockSpec((1, 1), lambda i: (0, 0)),           # b2
            ],
            out_specs=pl.BlockSpec((1, tb_eff), lambda i: (0, i)),  # lane-dense
        ),
        compiler_params=pltpu.CompilerParams(
            dimension_semantics=("parallel",),   # batch tiles independent -> v7x 2 TCs
            vmem_limit_bytes=vmem_limit,
        ),
    )(xT, w1_k, b1_col, w2_col, b2_2d)

    return out_T[0, :B].reshape(B, 1).astype(jnp.float32)


if __name__ == "__main__":
    key = jax.random.PRNGKey(0)
    k_x, k_w1, k_b1, k_w2, k_b2 = jax.random.split(key, 5)

    B = 8
    x = jax.random.normal(k_x, (B, 10), dtype=jnp.float32)

    # Deterministic parameter init (PyTorch nn.Linear shapes: (out, in) and (out,))
    w1 = jax.random.normal(k_w1, (16, 10), dtype=jnp.float32) * 0.1
    b1 = jax.random.normal(k_b1, (16,), dtype=jnp.float32) * 0.1
    w2 = jax.random.normal(k_w2, (1, 16), dtype=jnp.float32) * 0.1
    b2 = jax.random.normal(k_b2, (1,), dtype=jnp.float32) * 0.1

    # Reference in plain JAX (same math as the PyTorch forward).
    ref = jax.nn.sigmoid(jnp.maximum(x @ w1.T + b1, 0.0) @ w2.T + b2)

    # Default bf16-I/O path (half the HBM traffic, f32 accumulate).
    out_bf16 = jax.block_until_ready(simple_nn_forward(x, w1, b1, w2, b2))
    assert out_bf16.shape == (B, 1)
    assert jnp.allclose(out_bf16, ref, atol=2e-2, rtol=2e-2)

    # Strict-parity f32 path (Precision.HIGHEST on the MXU).
    out_f32 = jax.block_until_ready(
        simple_nn_forward(x, w1, b1, w2, b2, precision="f32"))
    assert jnp.allclose(out_f32, ref, atol=1e-4, rtol=1e-4)

    # Feature-major contract: no wrapper-side transpose at all.
    out_fm = jax.block_until_ready(
        simple_nn_forward(x.T, w1, b1, w2, b2, x_feature_major=True))
    assert jnp.allclose(out_fm, ref, atol=2e-2, rtol=2e-2)

    print("KERNEL_OK")
</pallas_src>

<mosaic_0001>
module attributes {stable_mosaic.version = 11 : i64} {
  func.func @kernel(%arg0: i32, %arg1: memref<10x128xbf16, #tpu.memory_space<vmem>>, %arg2: memref<16x10xbf16, #tpu.memory_space<vmem>>, %arg3: memref<16x1xf32, #tpu.memory_space<vmem>>, %arg4: memref<16x1xf32, #tpu.memory_space<vmem>>, %arg5: memref<1x1xf32, #tpu.memory_space<vmem>>, %arg6: memref<1x128xf32, #tpu.memory_space<vmem>>) attributes {dimension_semantics = [#tpu.dimension_semantics<parallel>], iteration_bounds = array<i64: 1>, scalar_prefetch = 0 : i64, scratch_operands = 0 : i64, tpu.core_type = #tpu.core_type<tc>, window_params = [{transform_indices = @transform_0, window_bounds = array<i64: 10, 128>}, {pipeline_mode = #tpu.pipeline_mode<synchronous>, transform_indices = @transform_1, window_bounds = array<i64: 16, 10>}, {pipeline_mode = #tpu.pipeline_mode<synchronous>, transform_indices = @transform_2, window_bounds = array<i64: 16, 1>}, {pipeline_mode = #tpu.pipeline_mode<synchronous>, transform_indices = @transform_3, window_bounds = array<i64: 16, 1>}, {pipeline_mode = #tpu.pipeline_mode<synchronous>, transform_indices = @transform_4, window_bounds = array<i64: 1, 1>}, {transform_indices = @transform_5, window_bounds = array<i64: 1, 128>}]} {
    %c0 = arith.constant 0 : index
    %c0_0 = arith.constant 0 : index
    %0 = vector.load %arg2[%c0, %c0_0] : memref<16x10xbf16, #tpu.memory_space<vmem>>, vector<16x10xbf16>
    %c0_1 = arith.constant 0 : index
    %c0_2 = arith.constant 0 : index
    %1 = vector.load %arg3[%c0_1, %c0_2] : memref<16x1xf32, #tpu.memory_space<vmem>>, vector<16x1xf32>
    %c0_3 = arith.constant 0 : index
    %c0_4 = arith.constant 0 : index
    %2 = vector.load %arg4[%c0_3, %c0_4] : memref<16x1xf32, #tpu.memory_space<vmem>>, vector<16x1xf32>
    %c0_5 = arith.constant 0 : index
    %c0_6 = arith.constant 0 : index
    %3 = vector.load %arg5[%c0_5, %c0_6] : memref<1x1xf32, #tpu.memory_space<vmem>>, vector<1x1xf32>
    %c0_7 = arith.constant 0 : index
    %c0_8 = arith.constant 0 : index
    %4 = vector.load %arg1[%c0_7, %c0_8] : memref<10x128xbf16, #tpu.memory_space<vmem>>, vector<10x128xbf16>
    %cst = arith.constant dense<0.000000e+00> : vector<16x128xf32>
    %5 = tpu.matmul %0, %4, %cst {dimension_numbers = #tpu.dot_dimension_numbers<[1], [0], [0], [1], [0, 0, 1, 1], [], []>} : vector<16x10xbf16>, vector<10x128xbf16>, vector<16x128xf32> -> vector<16x128xf32>
    %6 = vector.broadcast %1 : vector<16x1xf32> to vector<16x128xf32>
    %7 = arith.addf %5, %6 : vector<16x128xf32>
    %cst_9 = arith.constant 0.000000e+00 : f32
    %8 = vector.broadcast %cst_9 : f32 to vector<16x128xf32>
    %9 = arith.maximumf %7, %8 : vector<16x128xf32>
    %10 = vector.broadcast %2 : vector<16x1xf32> to vector<16x128xf32>
    %11 = arith.mulf %10, %9 : vector<16x128xf32>
    %cst_10 = arith.constant dense<0.000000e+00> : vector<128xf32>
    %12 = vector.multi_reduction <add>, %11, %cst_10 [0] : vector<16x128xf32> to vector<128xf32>
    %13 = vector.shape_cast %12 : vector<128xf32> to vector<1x128xf32>
    %14 = vector.broadcast %3 : vector<1x1xf32> to vector<1x128xf32>
    %15 = arith.addf %13, %14 : vector<1x128xf32>
    %16 = arith.negf %15 : vector<1x128xf32>
    %17 = math.exp %16 : vector<1x128xf32>
    %cst_11 = arith.constant 1.000000e+00 : f32
    %18 = vector.broadcast %cst_11 : f32 to vector<1x128xf32>
    %19 = arith.addf %18, %17 : vector<1x128xf32>
    %20 = arith.divf %18, %19 : vector<1x128xf32>
    %c0_12 = arith.constant 0 : index
    %c0_13 = arith.constant 0 : index
    %21 = vector.load %arg6[%c0_12, %c0_13] : memref<1x128xf32, #tpu.memory_space<vmem>>, vector<1x128xf32>
    tpu.vector_store %arg6[%c0_12, %c0_13], %20 {strides = array<i32>} : memref<1x128xf32, #tpu.memory_space<vmem>>, vector<1x128xf32>,
    return
  }
  func.func @transform_0(%arg0: i32) -> (i32, i32) {
    %c0_i32 = arith.constant 0 : i32
    %c0_i32_0 = arith.constant 0 : i32
    return %c0_i32, %arg0 : i32, i32
  }
  func.func @transform_1(%arg0: i32) -> (i32, i32) {
    %c0_i32 = arith.constant 0 : i32
    %c0_i32_0 = arith.constant 0 : i32
    %c0_i32_1 = arith.constant 0 : i32
    return %c0_i32, %c0_i32_0 : i32, i32
  }
  func.func @transform_2(%arg0: i32) -> (i32, i32) {
    %c0_i32 = arith.constant 0 : i32
    %c0_i32_0 = arith.constant 0 : i32
    %c0_i32_1 = arith.constant 0 : i32
    return %c0_i32, %c0_i32_0 : i32, i32
  }
  func.func @transform_3(%arg0: i32) -> (i32, i32) {
    %c0_i32 = arith.constant 0 : i32
    %c0_i32_0 = arith.constant 0 : i32
    %c0_i32_1 = arith.constant 0 : i32
    return %c0_i32, %c0_i32_0 : i32, i32
  }
  func.func @transform_4(%arg0: i32) -> (i32, i32) {
    %c0_i32 = arith.constant 0 : i32
    %c0_i32_0 = arith.constant 0 : i32
    %c0_i32_1 = arith.constant 0 : i32
    return %c0_i32, %c0_i32_0 : i32, i32
  }
  func.func @transform_5(%arg0: i32) -> (i32, i32) {
    %c0_i32 = arith.constant 0 : i32
    %c0_i32_0 = arith.constant 0 : i32
    return %c0_i32, %arg0 : i32, i32
  }
}

</mosaic_0001>

<llo_original>
// kernel: simple_nn_forward.1
$region0: #{simple_nn_forward.1}
  #allocation0 [shape = 'u32[]', space=smem, size = 0x4, offset = 0x4, fixed_abs, tag = 'smem constant byte address 0x4 - core index']
  #allocation1 [shape = 'u32[144,128]{1,0:T(1,128)}', space=vmem, size = 0x12000, scoped, tag = 'internal scratch']
  #allocation2 [shape = 'f32[1,1]{1,0:T(1,128)S(1)}', space=vmem, size = 0x200, scoped, tag = 'scoped memory for simple_nn_forward.1']
  %s0 = inlined_call_operand.vmem [shape: bf16[10,128], index: 0, kind: input, shape index: {}]
  %s1 = inlined_call_operand.vmem [shape: bf16[16,10], index: 1, kind: input, shape index: {}]
  %s2 = inlined_call_operand.vmem [shape: f32[16,1], index: 2, kind: input, shape index: {}]
  %s3 = inlined_call_operand.vmem [shape: f32[16,1], index: 3, kind: input, shape index: {}]
  %s4 = inlined_call_operand.<no memory space> [shape: f32[1,1], index: 4, kind: input, shape index: {}]
  %s5 = inlined_call_operand.vmem [shape: f32[1,128], index: 5, kind: output, shape index: {}]
  %s6 = sld [smem:[#allocation0]]
  $region30: #{simple_nn_forward.1} parent=0
    _
  %s8 = ssub.s32 1, %s6
  %s9 = scalar_select 0, %s8, %s6
  %v10 = vstv %s4
  %11 = vst [vmem:[#allocation2] sm:$0x1] %v10
  // Predicated region
  $region2: #{simple_nn_forward.1} parent=0 // pred_check
    _
  $region3: #{simple_nn_forward.1} parent=0 // pred_check_branch
    %13 = sbr.rel (0) target = $region5
  $region4: #{simple_nn_forward.1} parent=0 // pred_region
    _
  $region5: #{simple_nn_forward.1} parent=0 // pred_fallthru
    _
  // Predicated region
  $region6: #{simple_nn_forward.1} parent=0 // pred_check
    _
  $region7: #{simple_nn_forward.1} parent=0 // pred_check_branch
    %15 = sbr.rel (0) target = $region9
  $region8: #{simple_nn_forward.1} parent=0 // pred_region
    _
  $region9: #{simple_nn_forward.1} parent=0 // pred_fallthru
    _
  // Predicated region
  $region10: #{simple_nn_forward.1} parent=0 // pred_check
    _
  $region11: #{simple_nn_forward.1} parent=0 // pred_check_branch
    %17 = sbr.rel (0) target = $region13
  $region12: #{simple_nn_forward.1} parent=0 // pred_region
    _
  $region13: #{simple_nn_forward.1} parent=0 // pred_fallthru
    _
  // Predicated region
  $region14: #{simple_nn_forward.1} parent=0 // pred_check
    _
  $region15: #{simple_nn_forward.1} parent=0 // pred_check_branch
    %19 = sbr.rel (0) target = $region17
  $region16: #{simple_nn_forward.1} parent=0 // pred_region
    _
  $region17: #{simple_nn_forward.1} parent=0 // pred_fallthru
    _
  // Predicated region
  $region18: #{simple_nn_forward.1} parent=0 // pred_check
    _
  $region19: #{simple_nn_forward.1} parent=0 // pred_check_branch
    %21 = sbr.rel (0) target = $region21
  $region20: #{simple_nn_forward.1} parent=0 // pred_region
    _
  $region21: #{simple_nn_forward.1} parent=0 // pred_fallthru
    _
  %v23 = vld [vmem:[%s1] sm:$0xf]
  %v24 = vld [vmem:[%s1 + $0x4] sm:$0xf]
  %v25 = vld [vmem:[%s2] sm:$0xff]
  %v26 = vld [vmem:[%s2 + $0x8] sm:$0xff]
  %v27 = vld [vmem:[%s3] sm:$0xff]
  %v28 = vld [vmem:[%s3 + $0x8] sm:$0xff]
  %v29 = vld [vmem:[#allocation2] sm:$0x1]
  %v30 = vld [vmem:[%s0] sm:$0xf]
  %v31 = vld [vmem:[%s0 + $0x4] sm:$0x1]
  %33 = vset.pattern.permute.xlu0 0
  %34 = vperm.xlu0 %33, %v25
  %v35 = vpop.permute.xlu0 %34
  %38 = vset.pattern.permute.xlu0 0
  %39 = vperm.xlu0 %38, %v26
  %v40 = vpop.permute.xlu0 %39
  %v44 = vunpack.c.l.b16 %v23
  %v45 = vunpack.c.l.b16 %v24
  %v46 = vpack.c.b16 %v45, %v44
  %v49 = vunpack.c.l.b16 %v30
  %v50 = vunpack.c.l.b16 %v31
  %v51 = vpack.c.b16 %v50, %v49
  %vm52 = vcmask 80896
  %v54 = vsel %vm52, %v46, 0
  %vm56 = vcmask 1044480
  %v58 = vsel %vm56, %v51, 0
  %60 = vmatprep.subr.bf16.mxu0 0
  %61 = vmatpush1.bf16.msra.mxu0 %v58
  %62 = vmatprep.subr.bf16.mxu0 0
  %63 = vmatpush1.bf16.msra.mxu0 0
  %64 = vmatprep.subr.bf16.mxu0 0
  %65 = vmatpush1.bf16.msra.mxu0 0
  %66 = vmatprep.subr.bf16.mxu0 0
  %67 = vmatpush1.bf16.msra.mxu0 0
  %68 = vmatprep.subr.bf16.mxu0 0
  %69 = vmatpush1.bf16.msra.mxu0 0
  %70 = vmatprep.subr.bf16.mxu0 0
  %71 = vmatpush1.bf16.msra.mxu0 0
  %72 = vmatprep.subr.bf16.mxu0 0
  %73 = vmatpush1.bf16.msra.mxu0 0
  %74 = vmatprep.subr.bf16.mxu0 0
  %75 = vmatpush1.bf16.msra.mxu0 0
  %76 = vmatprep.subr.bf16.mxu0 0
  %77 = vmatpush1.bf16.msra.mxu0 0
  %78 = vmatprep.subr.bf16.mxu0 0
  %79 = vmatpush1.bf16.msra.mxu0 0
  %80 = vmatprep.subr.bf16.mxu0 0
  %81 = vmatpush1.bf16.msra.mxu0 0
  %82 = vmatprep.subr.bf16.mxu0 0
  %83 = vmatpush1.bf16.msra.mxu0 0
  %84 = vmatprep.subr.bf16.mxu0 0
  %85 = vmatpush1.bf16.msra.mxu0 0
  %86 = vmatprep.subr.bf16.mxu0 0
  %87 = vmatpush1.bf16.msra.mxu0 0
  %88 = vmatprep.subr.bf16.mxu0 0
  %89 = vmatpush1.bf16.msra.mxu0 0
  %90 = vmatprep.subr.bf16.mxu0 0
  %91 = vmatpush1.bf16.msra.mxu0 0
  %92 = vmatprep.mubr.bf16.mxu0 0
  %93 = vmatmul.mubr.bf16.gmra.mrb[0].mxu0 %v54
  %v94 = vpop.f32.mrb[0].mxu0
  %v95 = vadd.f32 %v35, %v94
  %v96 = vpop.f32.mrb[0].mxu0
  %v97 = vpop.f32.mrb[0].mxu0
  %v98 = vadd.f32 %v40, %v97
  %v99 = vpop.f32.mrb[0].mxu0
  %100 = vdwg.mxu0
  %v101 = vmax.f32 %v95, 0.0
  %v102 = vmax.f32 %v98, 0.0
  %104 = vset.pattern.permute.xlu0 0
  %105 = vperm.xlu0 %104, %v27
  %v106 = vpop.permute.xlu0 %105
  %109 = vset.pattern.permute.xlu0 0
  %110 = vperm.xlu0 %109, %v28
  %v111 = vpop.permute.xlu0 %110
  %v113 = vmul.f32 %v106, %v101
  %v114 = vmul.f32 %v111, %v102
  %v115 = vadd.f32 %v113, %v114
  %v116 = vrot.slane %v115, 4
  %v117 = vadd.f32 %v115, %v116
  %v118 = vrot.slane %v117, 2
  %v119 = vadd.f32 %v117, %v118
  %v120 = vrot.slane %v119, 1
  %v121 = vadd.f32 %v119, %v120
  %123 = vset.pattern.permute.xlu0 0
  %124 = vperm.xlu0 %123, %v29
  %v125 = vpop.permute.xlu0 %124
  %v127 = vlaneseq
  %v128 = vshrl.u32 %v127, 7
  %v129 = vsub.s32 0, %v128
  %v130 = vrot.slane %v125, %v129
  %v131 = vadd.f32 %v121, %v130
  %v132 = vxor.u32 %v131, 2147483648
  %v133 = vmul.f32 %v132, 1.442695
  %v134 = vpow.pop %v133
  %v135 = vadd.f32 %v134, 1.0
  %v136 = vrcp.pop %v135
  %v137 = vmul.f32 1.0, %v136
  %138 = vst [vmem:[%s5] sm:$0x1] %v137
  // Predicated region
  $region22: #{simple_nn_forward.1} parent=0 // pred_check
    _
  $region23: #{simple_nn_forward.1} parent=0 // pred_check_branch
    %140 = sbr.rel (0) target = $region25
  $region24: #{simple_nn_forward.1} parent=0 // pred_region
    _
  $region25: #{simple_nn_forward.1} parent=0 // pred_fallthru
    _
  // Predicated region
  $region26: #{simple_nn_forward.1} parent=0 // pred_check
    _
  $region27: #{simple_nn_forward.1} parent=0 // pred_check_branch
    %142 = sbr.rel (0) target = $region29
  $region28: #{simple_nn_forward.1} parent=0 // pred_region
    _
  $region29: #{simple_nn_forward.1} parent=0 // pred_fallthru
    _

</llo_original>
